<compile_context>
chip_gen: v7x
topology: tpu7x:2x2x1
jax: 0.10.0
libtpu: 0.0.40
codegen_flags: <defaults>
</compile_context>

<pallas_src>
import functools

import jax
import jax.numpy as jnp
from jax.experimental import pallas as pl
from jax.experimental.pallas import tpu as pltpu


def _round_up(n, m):
    return (n + m - 1) // m * m


def _critic_kernel(x_ref, w1_ref, b1_ref, w2_ref, b2_ref, w3_ref, b3_ref,
                   out_ref, *, compute_dtype):
    # x: (bm, Din) f32, w1: (Din, H), w2: (H, H), w3: (H, 1)  [compute_dtype]
    # b1/b2: (1, H) f32 in VMEM, b3: (1, 1) f32 in SMEM, out: (bm, 1) f32.

    # Cast the f32 input tile to the MXU dtype inside the kernel (no wrapper
    # launches; garbage rows of a partial last block never reach valid output).
    x = x_ref[...].astype(compute_dtype)

    # fc1 — single MXU pass against the stacked (Ds+Da, H) weight, f32 accumulate.
    h = jnp.dot(x, w1_ref[...], preferred_element_type=jnp.float32)
    # Bias-add in f32, then downcast + ReLU in compute dtype (same values as
    # relu-then-cast, half the VPU work when compute_dtype is bf16).
    h = jnp.maximum((h + b1_ref[...]).astype(compute_dtype), 0)

    # fc2
    h = jnp.dot(h, w2_ref[...], preferred_element_type=jnp.float32)
    h = jnp.maximum((h + b2_ref[...]).astype(compute_dtype), 0)

    # fc3 — (bm, H) @ (H, 1): MXU-natural, no transpose of the activation.
    q = jnp.dot(h, w3_ref[...], preferred_element_type=jnp.float32)
    out_ref[...] = (q + b3_ref[0, 0]).astype(out_ref.dtype)


def maddpg_critic_forward(states, actions, params, *, block_batch=2048,
                          target_num_blocks=2, compute_dtype=jnp.bfloat16):
    """Pallas equivalent of MADDPGCritic.forward(states, actions) -> (B, 1)."""
    B = states.shape[0]

    # The only wrapper-side op: one tiny f32 concatenate, so fc1 is one MXU pass.
    x = jnp.concatenate([states, actions], axis=1)
    Din = x.shape[1]
    H = params["w2"].shape[0]

    # Batch tile: sized for TensorCore occupancy / per-step overhead, not VMEM
    # (a bm=2048 tile is ~2 MB, far below every generation's scoped limit).
    #   target_num_blocks=2  -> one block per v7x TensorCore + pipelined DMA.
    #   block_batch cap      -> short grids on single-TC v5e/v6e for huge B.
    bm = min(block_batch, _round_up(pl.cdiv(B, target_num_blocks), 16))
    bm = min(bm, B)                      # tiny B: one full-extent block
    grid = (pl.cdiv(B, bm),)

    kernel = functools.partial(_critic_kernel, compute_dtype=compute_dtype)

    # Weights/biases: full blocks with a constant block index -> DMA'd once,
    # VMEM-resident across the whole batch grid.
    const = lambda shape: pl.BlockSpec(shape, lambda i: (0, 0))

    q = pl.pallas_call(
        kernel,
        out_shape=jax.ShapeDtypeStruct((B, 1), jnp.float32),
        grid_spec=pltpu.PrefetchScalarGridSpec(
            num_scalar_prefetch=0,
            grid=grid,
            in_specs=[
                pl.BlockSpec((bm, Din), lambda i: (i, 0)),           # x tile (f32)
                const((Din, H)),                                     # w1
                const((1, H)),                                       # b1 (f32)
                const((H, H)),                                       # w2
                const((1, H)),                                       # b2 (f32)
                const((H, 1)),                                       # w3 column
                pl.BlockSpec(memory_space=pltpu.MemorySpace.SMEM),   # b3 scalar
            ],
            out_specs=pl.BlockSpec((bm, 1), lambda i: (i, 0)),
        ),
        compiler_params=pltpu.CompilerParams(
            dimension_semantics=("parallel",)),
    )(x, params["w1"], params["b1"], params["w2"], params["b2"],
      params["w3"], params["b3"])
    return q


def init_params(key, state_dim, action_dim, n_agents, hidden_dim,
                weight_dtype=jnp.bfloat16):
    """nn.Linear-style init (U[-1/sqrt(fan_in), +1/sqrt(fan_in)]).

    w1 is stored stacked (Din, H) so fc1 is a single dot; w3 is kept as an
    (H, 1) column so fc3 contracts in the MXU-natural orientation.
    hidden_dim should be a multiple of 128 (lane-aligned); 256 fills the
    v6e/v7x MXU better than 128 if the model allows it.
    """
    din = state_dim * n_agents + action_dim * n_agents

    def linear(k, fan_in, fan_out):
        kw, kb = jax.random.split(k)
        bound = 1.0 / (fan_in ** 0.5)
        w = jax.random.uniform(kw, (fan_in, fan_out), jnp.float32, -bound, bound)
        b = jax.random.uniform(kb, (1, fan_out), jnp.float32, -bound, bound)
        return w, b

    k1, k2, k3 = jax.random.split(key, 3)
    w1, b1 = linear(k1, din, hidden_dim)          # (Din, H): x @ w1
    w2, b2 = linear(k2, hidden_dim, hidden_dim)   # (H, H)
    w3, b3 = linear(k3, hidden_dim, 1)            # (H, 1) column
    return {
        "w1": w1.astype(weight_dtype),            # (Din, H)
        "b1": b1,                                 # (1, H) f32
        "w2": w2.astype(weight_dtype),            # (H, H)
        "b2": b2,                                 # (1, H) f32
        "w3": w3.astype(weight_dtype),            # (H, 1)
        "b3": b3,                                 # (1, 1) f32
    }


def _reference(states, actions, p):
    """Pure-JAX reference mirroring the kernel's bf16 rounding points."""
    f32, bf16 = jnp.float32, jnp.bfloat16
    x = jnp.concatenate([states, actions], axis=1).astype(bf16).astype(f32)
    h = jnp.maximum(x @ p["w1"].astype(f32) + p["b1"], 0.0)
    h = h.astype(bf16).astype(f32)
    h = jnp.maximum(h @ p["w2"].astype(f32) + p["b2"], 0.0)
    h = h.astype(bf16).astype(f32)
    return h @ p["w3"].astype(f32) + p["b3"]


if __name__ == "__main__":
    # Small shapes consistent with the module's forward:
    #   states: (batch, state_dim * n_agents), actions: (batch, action_dim * n_agents)
    batch, state_dim, action_dim, n_agents, hidden_dim = 4, 8, 4, 3, 128

    key = jax.random.PRNGKey(0)
    kp, ks, ka = jax.random.split(key, 3)

    params = init_params(kp, state_dim, action_dim, n_agents, hidden_dim)
    states = jax.random.normal(ks, (batch, state_dim * n_agents), jnp.float32)
    actions = jax.random.normal(ka, (batch, action_dim * n_agents), jnp.float32)

    q = maddpg_critic_forward(states, actions, params)
    jax.block_until_ready(q)

    q_ref = _reference(states, actions, params)
    assert q.shape == (batch, 1)
    assert jnp.allclose(q, q_ref, atol=2e-2, rtol=2e-2), (q, q_ref)

    print("KERNEL_OK")
</pallas_src>

<mosaic_0001>
module attributes {stable_mosaic.version = 11 : i64} {
  func.func @_critic_kernel(%arg0: i32, %arg1: memref<4x36xf32, #tpu.memory_space<vmem>>, %arg2: memref<36x128xbf16, #tpu.memory_space<vmem>>, %arg3: memref<1x128xf32, #tpu.memory_space<vmem>>, %arg4: memref<128x128xbf16, #tpu.memory_space<vmem>>, %arg5: memref<1x128xf32, #tpu.memory_space<vmem>>, %arg6: memref<128x1xbf16, #tpu.memory_space<vmem>>, %arg7: memref<1x1xf32, #tpu.memory_space<smem>>, %arg8: memref<4x1xf32, #tpu.memory_space<vmem>>) attributes {dimension_semantics = [#tpu.dimension_semantics<parallel>], iteration_bounds = array<i64: 1>, scalar_prefetch = 0 : i64, scratch_operands = 0 : i64, tpu.core_type = #tpu.core_type<tc>, window_params = [{transform_indices = @transform_0, window_bounds = array<i64: 4, 36>}, {pipeline_mode = #tpu.pipeline_mode<synchronous>, transform_indices = @transform_1, window_bounds = array<i64: 36, 128>}, {pipeline_mode = #tpu.pipeline_mode<synchronous>, transform_indices = @transform_2, window_bounds = array<i64: 1, 128>}, {pipeline_mode = #tpu.pipeline_mode<synchronous>, transform_indices = @transform_3, window_bounds = array<i64: 128, 128>}, {pipeline_mode = #tpu.pipeline_mode<synchronous>, transform_indices = @transform_4, window_bounds = array<i64: 1, 128>}, {pipeline_mode = #tpu.pipeline_mode<synchronous>, transform_indices = @transform_5, window_bounds = array<i64: 128, 1>}, {transform_indices = @transform_6, window_bounds = array<i64: 1, 1>}, {transform_indices = @transform_7, window_bounds = array<i64: 4, 1>}]} {
    %c0 = arith.constant 0 : index
    %c0_0 = arith.constant 0 : index
    %0 = vector.load %arg1[%c0, %c0_0] : memref<4x36xf32, #tpu.memory_space<vmem>>, vector<4x36xf32>
    %1 = arith.truncf %0 : vector<4x36xf32> to vector<4x36xbf16>
    %c0_1 = arith.constant 0 : index
    %c0_2 = arith.constant 0 : index
    %2 = vector.load %arg2[%c0_1, %c0_2] : memref<36x128xbf16, #tpu.memory_space<vmem>>, vector<36x128xbf16>
    %cst = arith.constant dense<0.000000e+00> : vector<4x128xf32>
    %3 = tpu.matmul %1, %2, %cst {dimension_numbers = #tpu.dot_dimension_numbers<[1], [0], [0], [1], [0, 0, 1, 1], [], []>} : vector<4x36xbf16>, vector<36x128xbf16>, vector<4x128xf32> -> vector<4x128xf32>
    %c0_3 = arith.constant 0 : index
    %c0_4 = arith.constant 0 : index
    %4 = vector.load %arg3[%c0_3, %c0_4] : memref<1x128xf32, #tpu.memory_space<vmem>>, vector<1x128xf32>
    %5 = vector.broadcast %4 : vector<1x128xf32> to vector<4x128xf32>
    %6 = arith.addf %3, %5 : vector<4x128xf32>
    %7 = arith.truncf %6 : vector<4x128xf32> to vector<4x128xbf16>
    %cst_5 = arith.constant 0.000000e+00 : bf16
    %8 = vector.broadcast %cst_5 : bf16 to vector<4x128xbf16>
    %9 = arith.maximumf %7, %8 : vector<4x128xbf16>
    %c0_6 = arith.constant 0 : index
    %c0_7 = arith.constant 0 : index
    %10 = vector.load %arg4[%c0_6, %c0_7] : memref<128x128xbf16, #tpu.memory_space<vmem>>, vector<128x128xbf16>
    %cst_8 = arith.constant dense<0.000000e+00> : vector<4x128xf32>
    %11 = tpu.matmul %9, %10, %cst_8 {dimension_numbers = #tpu.dot_dimension_numbers<[1], [0], [0], [1], [0, 0, 1, 1], [], []>} : vector<4x128xbf16>, vector<128x128xbf16>, vector<4x128xf32> -> vector<4x128xf32>
    %c0_9 = arith.constant 0 : index
    %c0_10 = arith.constant 0 : index
    %12 = vector.load %arg5[%c0_9, %c0_10] : memref<1x128xf32, #tpu.memory_space<vmem>>, vector<1x128xf32>
    %13 = vector.broadcast %12 : vector<1x128xf32> to vector<4x128xf32>
    %14 = arith.addf %11, %13 : vector<4x128xf32>
    %15 = arith.truncf %14 : vector<4x128xf32> to vector<4x128xbf16>
    %cst_11 = arith.constant 0.000000e+00 : bf16
    %16 = vector.broadcast %cst_11 : bf16 to vector<4x128xbf16>
    %17 = arith.maximumf %15, %16 : vector<4x128xbf16>
    %c0_12 = arith.constant 0 : index
    %c0_13 = arith.constant 0 : index
    %18 = vector.load %arg6[%c0_12, %c0_13] : memref<128x1xbf16, #tpu.memory_space<vmem>>, vector<128x1xbf16>
    %cst_14 = arith.constant dense<0.000000e+00> : vector<4x1xf32>
    %19 = tpu.matmul %17, %18, %cst_14 {dimension_numbers = #tpu.dot_dimension_numbers<[1], [0], [0], [1], [0, 0, 1, 1], [], []>} : vector<4x128xbf16>, vector<128x1xbf16>, vector<4x1xf32> -> vector<4x1xf32>
    %c0_15 = arith.constant 0 : index
    %c0_16 = arith.constant 0 : index
    %20 = memref.load %arg7[%c0_15, %c0_16] : memref<1x1xf32, #tpu.memory_space<smem>>
    %21 = vector.broadcast %20 : f32 to vector<4x1xf32>
    %22 = arith.addf %19, %21 : vector<4x1xf32>
    %c0_17 = arith.constant 0 : index
    %c0_18 = arith.constant 0 : index
    %23 = vector.load %arg8[%c0_17, %c0_18] : memref<4x1xf32, #tpu.memory_space<vmem>>, vector<4x1xf32>
    tpu.vector_store %arg8[%c0_17, %c0_18], %22 {strides = array<i32>} : memref<4x1xf32, #tpu.memory_space<vmem>>, vector<4x1xf32>,
    return
  }
  func.func @transform_0(%arg0: i32) -> (i32, i32) {
    %c0_i32 = arith.constant 0 : i32
    %c0_i32_0 = arith.constant 0 : i32
    return %arg0, %c0_i32 : i32, i32
  }
  func.func @transform_1(%arg0: i32) -> (i32, i32) {
    %c0_i32 = arith.constant 0 : i32
    %c0_i32_0 = arith.constant 0 : i32
    %c0_i32_1 = arith.constant 0 : i32
    return %c0_i32, %c0_i32_0 : i32, i32
  }
  func.func @transform_2(%arg0: i32) -> (i32, i32) {
    %c0_i32 = arith.constant 0 : i32
    %c0_i32_0 = arith.constant 0 : i32
    %c0_i32_1 = arith.constant 0 : i32
    return %c0_i32, %c0_i32_0 : i32, i32
  }
  func.func @transform_3(%arg0: i32) -> (i32, i32) {
    %c0_i32 = arith.constant 0 : i32
    %c0_i32_0 = arith.constant 0 : i32
    %c0_i32_1 = arith.constant 0 : i32
    return %c0_i32, %c0_i32_0 : i32, i32
  }
  func.func @transform_4(%arg0: i32) -> (i32, i32) {
    %c0_i32 = arith.constant 0 : i32
    %c0_i32_0 = arith.constant 0 : i32
    %c0_i32_1 = arith.constant 0 : i32
    return %c0_i32, %c0_i32_0 : i32, i32
  }
  func.func @transform_5(%arg0: i32) -> (i32, i32) {
    %c0_i32 = arith.constant 0 : i32
    %c0_i32_0 = arith.constant 0 : i32
    %c0_i32_1 = arith.constant 0 : i32
    return %c0_i32, %c0_i32_0 : i32, i32
  }
  func.func @transform_6(%arg0: i32) -> (i32, i32) {
    %c0_i32 = arith.constant 0 : i32
    %c0_i32_0 = arith.constant 0 : i32
    %c0_i32_1 = arith.constant 0 : i32
    return %c0_i32, %c0_i32_0 : i32, i32
  }
  func.func @transform_7(%arg0: i32) -> (i32, i32) {
    %c0_i32 = arith.constant 0 : i32
    %c0_i32_0 = arith.constant 0 : i32
    return %arg0, %c0_i32 : i32, i32
  }
}

</mosaic_0001>

<llo_original>
// kernel: tpu_custom_call.1
$region0: #{tpu_custom_call.1}
  #allocation0 [shape = 'u32[]', space=smem, size = 0x4, offset = 0x4, fixed_abs, tag = 'smem constant byte address 0x4 - core index']
  #allocation1 [shape = 'u32[144,128]{1,0:T(1,128)}', space=vmem, size = 0x12000, scoped, tag = 'internal scratch']
  #allocation2 [shape = 'f32[1,1]{1,0:T(1,128)S(6)}', space=smem, size = 0x200, scoped, tag = 'scoped memory for tpu_custom_call.1']
  %s0 = inlined_call_operand.vmem [shape: f32[4,36], index: 0, kind: input, shape index: {}]
  %s1 = inlined_call_operand.hbm [shape: bf16[36,128], index: 1, kind: input, shape index: {}]
  %s2 = inlined_call_operand.vmem [shape: f32[1,128], index: 2, kind: input, shape index: {}]
  %s3 = inlined_call_operand.vmem [shape: bf16[128,128], index: 3, kind: input, shape index: {}]
  %s4 = inlined_call_operand.vmem [shape: f32[1,128], index: 4, kind: input, shape index: {}]
  %s5 = inlined_call_operand.vmem [shape: bf16[128,1], index: 5, kind: input, shape index: {}]
  %s6 = inlined_call_operand.<no memory space> [shape: f32[1,1], index: 6, kind: input, shape index: {}]
  %s7 = inlined_call_operand.vmem [shape: f32[4,1], index: 7, kind: output, shape index: {}]
  %s8 = sld [smem:[#allocation0]]
  $region42: #{tpu_custom_call.1} parent=0
    _
  %s10 = ssub.s32 1, %s8
  %s11 = scalar_select 0, %s10, %s8
  %12 = sst [smem:[#allocation2]] %s6
  $region1: #{tpu_custom_call.1} parent=0
    #allocation3 [shape = 'u8[10240]{0}', space=vmem, size = 0x2800, scoped, tag = 'input window, operand 1, single buffered']
    #allocation4 [shape = 's32[1]{0}', space=sflag, size = 0x4, scoped, tag = 'scoped memory for tpu_custom_call.1']
    %13 = vsyncpa [#allocation4], 0
    // Predicated region
    $region2: #{tpu_custom_call.1} parent=1 // pred_check
      _
    $region3: #{tpu_custom_call.1} parent=1 // pred_check_branch
      %15 = sbr.rel (0) target = $region5
    $region4: #{tpu_custom_call.1} parent=1 // pred_region
      _
    $region5: #{tpu_custom_call.1} parent=1 // pred_fallthru
      _
    // Predicated region
    $region6: #{tpu_custom_call.1} parent=1 // pred_check
      _
    $region7: #{tpu_custom_call.1} parent=1 // pred_check_branch
      %17 = sbr.rel (0) target = $region9
    $region8: #{tpu_custom_call.1} parent=1 // pred_region
      %s19 = ssub.s32 320, 320
      %20 = vsyncadd [#allocation4], %s19
      %s21 = sshll.u32 [#allocation3], 4
      %s22 = int_to_ptr.vmem [resolvable:$true] %s21
      %27 = dma.hbm_to_vmem [thread:$0]  %s1, 320, %s22, [#allocation4], 64, 64, 4
    $region9: #{tpu_custom_call.1} parent=1 // pred_fallthru
      _
    // Predicated region
    $region10: #{tpu_custom_call.1} parent=1 // pred_check
      _
    $region11: #{tpu_custom_call.1} parent=1 // pred_check_branch
      %29 = sbr.rel (0) target = $region13
    $region12: #{tpu_custom_call.1} parent=1 // pred_region
      _
    $region13: #{tpu_custom_call.1} parent=1 // pred_fallthru
      _
    // Predicated region
    $region14: #{tpu_custom_call.1} parent=1 // pred_check
      _
    $region15: #{tpu_custom_call.1} parent=1 // pred_check_branch
      %31 = sbr.rel (0) target = $region17
    $region16: #{tpu_custom_call.1} parent=1 // pred_region
      _
    $region17: #{tpu_custom_call.1} parent=1 // pred_fallthru
      _
    // Predicated region
    $region18: #{tpu_custom_call.1} parent=1 // pred_check
      _
    $region19: #{tpu_custom_call.1} parent=1 // pred_check_branch
      %33 = sbr.rel (0) target = $region21
    $region20: #{tpu_custom_call.1} parent=1 // pred_region
      _
    $region21: #{tpu_custom_call.1} parent=1 // pred_fallthru
      _
    // Predicated region
    $region22: #{tpu_custom_call.1} parent=1 // pred_check
      _
    $region23: #{tpu_custom_call.1} parent=1 // pred_check_branch
      %35 = sbr.rel (0) target = $region25
    $region24: #{tpu_custom_call.1} parent=1 // pred_region
      _
    $region25: #{tpu_custom_call.1} parent=1 // pred_fallthru
      _
    // Predicated region
    $region26: #{tpu_custom_call.1} parent=1 // pred_check
      _
    $region27: #{tpu_custom_call.1} parent=1 // pred_check_branch
      %37 = sbr.rel (0) target = $region29
    $region28: #{tpu_custom_call.1} parent=1 // pred_region
      _
    $region29: #{tpu_custom_call.1} parent=1 // pred_fallthru
      _
    // Predicated region
    $region30: #{tpu_custom_call.1} parent=1 // pred_check
      _
    $region31: #{tpu_custom_call.1} parent=1 // pred_check_branch
      %39 = sbr.rel (0) target = $region33
    $region32: #{tpu_custom_call.1} parent=1 // pred_region
      %40 = dma.done [#allocation4], 320
    $region33: #{tpu_custom_call.1} parent=1 // pred_fallthru
      _
    %v42 = vld [vmem:[%s0] sm:$0xf]
    %v43 = vpack.c.bf16 %v42, %v42
    %v44 = vld [vmem:[#allocation3] sm:$0xf]
    %v45 = vld [vmem:[#allocation3 + $0x4] sm:$0xf]
    %v46 = vld [vmem:[#allocation3 + $0x8] sm:$0xf]
    %v47 = vld [vmem:[#allocation3 + $0xc] sm:$0xf]
    %v48 = vld [vmem:[#allocation3 + $0x10] sm:$0x3]
    %v49 = vld [vmem:[%s2] sm:$0x1]
    %v51 = vlaneseq
    %v52 = vshrl.u32 %v51, 7
    %v53 = vsub.s32 0, %v52
    %v54 = vrot.slane %v49, %v53
    %v61 = vunpack.c.l.b16 %v44
    %v62 = vunpack.c.l.b16 %v45
    %v63 = vunpack.c.l.b16 %v46
    %v64 = vunpack.c.l.b16 %v47
    %v65 = vunpack.c.l.b16 %v48
    %v66 = vpack.c.b16 %v62, %v61
    %v67 = vpack.c.b16 %v64, %v63
    %v68 = vpack.c.b16 %v65, %v65
    %vm71 = vcmask 293888
    %v73 = vsel %vm71, %v43, 0
    %vm75 = vcmask 1041408
    %v77 = vsel %vm75, %v68, 0
    %79 = vmatprep.subr.bf16.mxu0 0
    %80 = vmatpush1.bf16.msra.mxu0 %v66
    %81 = vmatprep.subr.bf16.mxu0 0
    %82 = vmatpush1.bf16.msra.mxu0 %v67
    %83 = vmatprep.subr.bf16.mxu0 0
    %84 = vmatpush1.bf16.msra.mxu0 %v77
    %85 = vmatprep.subr.bf16.mxu0 0
    %86 = vmatpush1.bf16.msra.mxu0 0
    %87 = vmatprep.subr.bf16.mxu0 0
    %88 = vmatpush1.bf16.msra.mxu0 0
    %89 = vmatprep.subr.bf16.mxu0 0
    %90 = vmatpush1.bf16.msra.mxu0 0
    %91 = vmatprep.subr.bf16.mxu0 0
    %92 = vmatpush1.bf16.msra.mxu0 0
    %93 = vmatprep.subr.bf16.mxu0 0
    %94 = vmatpush1.bf16.msra.mxu0 0
    %95 = vmatprep.subr.bf16.mxu0 0
    %96 = vmatpush1.bf16.msra.mxu0 0
    %97 = vmatprep.subr.bf16.mxu0 0
    %98 = vmatpush1.bf16.msra.mxu0 0
    %99 = vmatprep.subr.bf16.mxu0 0
    %100 = vmatpush1.bf16.msra.mxu0 0
    %101 = vmatprep.subr.bf16.mxu0 0
    %102 = vmatpush1.bf16.msra.mxu0 0
    %103 = vmatprep.subr.bf16.mxu0 0
    %104 = vmatpush1.bf16.msra.mxu0 0
    %105 = vmatprep.subr.bf16.mxu0 0
    %106 = vmatpush1.bf16.msra.mxu0 0
    %107 = vmatprep.subr.bf16.mxu0 0
    %108 = vmatpush1.bf16.msra.mxu0 0
    %109 = vmatprep.subr.bf16.mxu0 0
    %110 = vmatpush1.bf16.msra.mxu0 0
    %111 = vmatprep.mubr.bf16.mxu0 0
    %112 = vmatmul.mubr.bf16.gmra.mrb[0].mxu0 %v73
    %v113 = vpop.f32.mrb[0].mxu0
    %v114 = vadd.f32 %v54, %v113
    %v115 = vpop.f32.mrb[0].mxu0
    %v116 = vpop.f32.mrb[0].mxu0
    %v117 = vpop.f32.mrb[0].mxu0
    %118 = vdwg.mxu0
    %v119 = vpack.c.bf16 %v114, %v114
    %v120 = vmax.bf16 %v119, 0
    %v121 = vld [vmem:[%s3] sm:$0xf]
    %v122 = vld [vmem:[%s3 + $0x4] sm:$0xf]
    %v123 = vld [vmem:[%s3 + $0x8] sm:$0xf]
    %v124 = vld [vmem:[%s3 + $0xc] sm:$0xf]
    %v125 = vld [vmem:[%s3 + $0x10] sm:$0xf]
    %v126 = vld [vmem:[%s3 + $0x14] sm:$0xf]
    %v127 = vld [vmem:[%s3 + $0x18] sm:$0xf]
    %v128 = vld [vmem:[%s3 + $0x1c] sm:$0xf]
    %v129 = vld [vmem:[%s3 + $0x20] sm:$0xf]
    %v130 = vld [vmem:[%s3 + $0x24] sm:$0xf]
    %v131 = vld [vmem:[%s3 + $0x28] sm:$0xf]
    %v132 = vld [vmem:[%s3 + $0x2c] sm:$0xf]
    %v133 = vld [vmem:[%s3 + $0x30] sm:$0xf]
    %v134 = vld [vmem:[%s3 + $0x34] sm:$0xf]
    %v135 = vld [vmem:[%s3 + $0x38] sm:$0xf]
    %v136 = vld [vmem:[%s3 + $0x3c] sm:$0xf]
    %v137 = vld [vmem:[%s4] sm:$0x1]
    %v139 = vlaneseq
    %v140 = vshrl.u32 %v139, 7
    %v141 = vsub.s32 0, %v140
    %v142 = vrot.slane %v137, %v141
    %v160 = vunpack.c.l.b16 %v121
    %v161 = vunpack.c.l.b16 %v122
    %v162 = vunpack.c.l.b16 %v123
    %v163 = vunpack.c.l.b16 %v124
    %v164 = vunpack.c.l.b16 %v125
    %v165 = vunpack.c.l.b16 %v126
    %v166 = vunpack.c.l.b16 %v127
    %v167 = vunpack.c.l.b16 %v128
    %v168 = vunpack.c.l.b16 %v129
    %v169 = vunpack.c.l.b16 %v130
    %v170 = vunpack.c.l.b16 %v131
    %v171 = vunpack.c.l.b16 %v132
    %v172 = vunpack.c.l.b16 %v133
    %v173 = vunpack.c.l.b16 %v134
    %v174 = vunpack.c.l.b16 %v135
    %v175 = vunpack.c.l.b16 %v136
    %v176 = vpack.c.b16 %v161, %v160
    %v177 = vpack.c.b16 %v163, %v162
    %v178 = vpack.c.b16 %v165, %v164
    %v179 = vpack.c.b16 %v167, %v166
    %v180 = vpack.c.b16 %v169, %v168
    %v181 = vpack.c.b16 %v171, %v170
    %v182 = vpack.c.b16 %v173, %v172
    %v183 = vpack.c.b16 %v175, %v174
    %192 = vmatprep.subr.bf16.mxu0 0
    %193 = vmatpush1.bf16.msra.mxu0 %v176
    %194 = vmatprep.subr.bf16.mxu0 0
    %195 = vmatpush1.bf16.msra.mxu0 %v177
    %196 = vmatprep.subr.bf16.mxu0 0
    %197 = vmatpush1.bf16.msra.mxu0 %v178
    %198 = vmatprep.subr.bf16.mxu0 0
    %199 = vmatpush1.bf16.msra.mxu0 %v179
    %200 = vmatprep.subr.bf16.mxu0 0
    %201 = vmatpush1.bf16.msra.mxu0 %v180
    %202 = vmatprep.subr.bf16.mxu0 0
    %203 = vmatpush1.bf16.msra.mxu0 %v181
    %204 = vmatprep.subr.bf16.mxu0 0
    %205 = vmatpush1.bf16.msra.mxu0 %v182
    %206 = vmatprep.subr.bf16.mxu0 0
    %207 = vmatpush1.bf16.msra.mxu0 %v183
    %208 = vmatprep.subr.bf16.mxu0 0
    %209 = vmatpush1.bf16.msra.mxu0 0
    %210 = vmatprep.subr.bf16.mxu0 0
    %211 = vmatpush1.bf16.msra.mxu0 0
    %212 = vmatprep.subr.bf16.mxu0 0
    %213 = vmatpush1.bf16.msra.mxu0 0
    %214 = vmatprep.subr.bf16.mxu0 0
    %215 = vmatpush1.bf16.msra.mxu0 0
    %216 = vmatprep.subr.bf16.mxu0 0
    %217 = vmatpush1.bf16.msra.mxu0 0
    %218 = vmatprep.subr.bf16.mxu0 0
    %219 = vmatpush1.bf16.msra.mxu0 0
    %220 = vmatprep.subr.bf16.mxu0 0
    %221 = vmatpush1.bf16.msra.mxu0 0
    %222 = vmatprep.subr.bf16.mxu0 0
    %223 = vmatpush1.bf16.msra.mxu0 0
    %224 = vmatprep.mubr.bf16.mxu0 0
    %225 = vmatmul.mubr.bf16.gmra.mrb[0].mxu0 %v120
    %v226 = vpop.f32.mrb[0].mxu0
    %v227 = vadd.f32 %v142, %v226
    %v228 = vpop.f32.mrb[0].mxu0
    %v229 = vpop.f32.mrb[0].mxu0
    %v230 = vpop.f32.mrb[0].mxu0
    %231 = vdwg.mxu0
    %v232 = vpack.c.bf16 %v227, %v227
    %v233 = vmax.bf16 %v232, 0
    %v234 = vld [vmem:[%s5] sm:$0xf]
    %v235 = vld [vmem:[%s5 + $0x4] sm:$0xf]
    %v236 = vld [vmem:[%s5 + $0x8] sm:$0xf]
    %v237 = vld [vmem:[%s5 + $0xc] sm:$0xf]
    %v238 = vld [vmem:[%s5 + $0x10] sm:$0xf]
    %v239 = vld [vmem:[%s5 + $0x14] sm:$0xf]
    %v240 = vld [vmem:[%s5 + $0x18] sm:$0xf]
    %v241 = vld [vmem:[%s5 + $0x1c] sm:$0xf]
    %v242 = vld [vmem:[%s5 + $0x20] sm:$0xf]
    %v243 = vld [vmem:[%s5 + $0x24] sm:$0xf]
    %v244 = vld [vmem:[%s5 + $0x28] sm:$0xf]
    %v245 = vld [vmem:[%s5 + $0x2c] sm:$0xf]
    %v246 = vld [vmem:[%s5 + $0x30] sm:$0xf]
    %v247 = vld [vmem:[%s5 + $0x34] sm:$0xf]
    %v248 = vld [vmem:[%s5 + $0x38] sm:$0xf]
    %v249 = vld [vmem:[%s5 + $0x3c] sm:$0xf]
    %s250 = sld [smem:[#allocation2]]
    %v251 = vstv %s250
    %v268 = vunpack.c.l.b16 %v234
    %v269 = vunpack.c.l.b16 %v235
    %v270 = vunpack.c.l.b16 %v236
    %v271 = vunpack.c.l.b16 %v237
    %v272 = vunpack.c.l.b16 %v238
    %v273 = vunpack.c.l.b16 %v239
    %v274 = vunpack.c.l.b16 %v240
    %v275 = vunpack.c.l.b16 %v241
    %v276 = vunpack.c.l.b16 %v242
    %v277 = vunpack.c.l.b16 %v243
    %v278 = vunpack.c.l.b16 %v244
    %v279 = vunpack.c.l.b16 %v245
    %v280 = vunpack.c.l.b16 %v246
    %v281 = vunpack.c.l.b16 %v247
    %v282 = vunpack.c.l.b16 %v248
    %v283 = vunpack.c.l.b16 %v249
    %v284 = vpack.c.b16 %v269, %v268
    %v285 = vpack.c.b16 %v271, %v270
    %v286 = vpack.c.b16 %v273, %v272
    %v287 = vpack.c.b16 %v275, %v274
    %v288 = vpack.c.b16 %v277, %v276
    %v289 = vpack.c.b16 %v279, %v278
    %v290 = vpack.c.b16 %v281, %v280
    %v291 = vpack.c.b16 %v283, %v282
    %300 = vmatprep.subr.bf16.mxu0 0
    %301 = vmatpush1.bf16.msra.mxu0 %v284
    %302 = vmatprep.subr.bf16.mxu0 0
    %303 = vmatpush1.bf16.msra.mxu0 %v285
    %304 = vmatprep.subr.bf16.mxu0 0
    %305 = vmatpush1.bf16.msra.mxu0 %v286
    %306 = vmatprep.subr.bf16.mxu0 0
    %307 = vmatpush1.bf16.msra.mxu0 %v287
    %308 = vmatprep.subr.bf16.mxu0 0
    %309 = vmatpush1.bf16.msra.mxu0 %v288
    %310 = vmatprep.subr.bf16.mxu0 0
    %311 = vmatpush1.bf16.msra.mxu0 %v289
    %312 = vmatprep.subr.bf16.mxu0 0
    %313 = vmatpush1.bf16.msra.mxu0 %v290
    %314 = vmatprep.subr.bf16.mxu0 0
    %315 = vmatpush1.bf16.msra.mxu0 %v291
    %316 = vmatprep.subr.bf16.mxu0 0
    %317 = vmatpush1.bf16.msra.mxu0 0
    %318 = vmatprep.subr.bf16.mxu0 0
    %319 = vmatpush1.bf16.msra.mxu0 0
    %320 = vmatprep.subr.bf16.mxu0 0
    %321 = vmatpush1.bf16.msra.mxu0 0
    %322 = vmatprep.subr.bf16.mxu0 0
    %323 = vmatpush1.bf16.msra.mxu0 0
    %324 = vmatprep.subr.bf16.mxu0 0
    %325 = vmatpush1.bf16.msra.mxu0 0
    %326 = vmatprep.subr.bf16.mxu0 0
    %327 = vmatpush1.bf16.msra.mxu0 0
    %328 = vmatprep.subr.bf16.mxu0 0
    %329 = vmatpush1.bf16.msra.mxu0 0
    %330 = vmatprep.subr.bf16.mxu0 0
    %331 = vmatpush1.bf16.msra.mxu0 0
    %332 = vmatprep.mubr.bf16.mxu0 0
    %333 = vmatmul.mubr.bf16.gmra.mrb[0].mxu0 %v233
    %v334 = vpop.f32.mrb[0].mxu0
    %v335 = vadd.f32 %v251, %v334
    %v336 = vpop.f32.mrb[0].mxu0
    %v337 = vpop.f32.mrb[0].mxu0
    %v338 = vpop.f32.mrb[0].mxu0
    %339 = vdwg.mxu0
    %vm340 = vcmask 3072
    %341 = vst.msk [vmem:[%s7] sm:$0xf] %vm340, %v335
    // Predicated region
    $region34: #{tpu_custom_call.1} parent=1 // pred_check
      _
    $region35: #{tpu_custom_call.1} parent=1 // pred_check_branch
      %343 = sbr.rel (0) target = $region37
    $region36: #{tpu_custom_call.1} parent=1 // pred_region
      _
    $region37: #{tpu_custom_call.1} parent=1 // pred_fallthru
      _
    // Predicated region
    $region38: #{tpu_custom_call.1} parent=1 // pred_check
      _
    $region39: #{tpu_custom_call.1} parent=1 // pred_check_branch
      %345 = sbr.rel (0) target = $region41
    $region40: #{tpu_custom_call.1} parent=1 // pred_region
      _
    $region41: #{tpu_custom_call.1} parent=1 // pred_fallthru
      _
    %346 = vsyncpa [#allocation4], 1

</llo_original>
